<compile_context>
chip_gen: v7x
topology: tpu7x:2x2x1
jax: 0.10.0
libtpu: 0.0.40
codegen_flags: <defaults>
</compile_context>

<pallas_src>
import functools

import jax
import jax.numpy as jnp
from jax.experimental import pallas as pl
from jax.experimental.pallas import tpu as pltpu


def rbf_kernel(x_ref, ct_ref, c2_ref, inv_ref, wt_ref, b_ref, out_ref):
    # x_ref   : (TB, F)    float32   batch tile
    # ct_ref  : (F, K)     float32   centers, pre-transposed
    # c2_ref  : (1, K)     float32   precomputed ||c||^2 per center
    # inv_ref : (1, K)     float32   precomputed -0.5 / variances
    # wt_ref  : (K, OP)    float32   linear weight, pre-transposed + lane-padded
    # b_ref   : (1, OP)    float32   bias, lane-padded
    # out_ref : (TB, OP)   float32
    x = x_ref[...]

    # Squared euclidean distances via ||x||^2 + ||c||^2 - 2 x.cT (MXU hot path).
    x2 = jnp.sum(x * x, axis=-1, keepdims=True)                        # (TB, 1)
    xc = jnp.dot(x, ct_ref[...], preferred_element_type=jnp.float32)   # (TB, K)
    d2 = jnp.maximum(x2 + c2_ref[...] - 2.0 * xc, 0.0)                 # cdist**2 >= 0

    # RBF activation: exp(-0.5 * d^2 / var) == exp(inv * d^2), single VPU mul + EUP exp.
    rbf = jnp.exp(inv_ref[...] * d2)                                   # (TB, K)

    # Output linear layer: rbf @ W.T + b, with W.T pre-materialized as (K, OP).
    out = jnp.dot(rbf, wt_ref[...], preferred_element_type=jnp.float32)
    out_ref[...] = out + b_ref[...]


def _round_up(n, m):
    return ((n + m - 1) // m) * m


@functools.partial(jax.jit, static_argnames=("batch_tile",))
def rbf_forward(x, centers, variances, w, b, *, batch_tile=128):
    """x:(B,F) centers:(K,F) variances:(1,K) w:(O,K) b:(O,) -> (B,O)."""
    B, F = x.shape
    K = centers.shape[0]
    O = w.shape[0]

    # --- wrapper-side precompute / layout plumbing (all static w.r.t. the batch) ---
    ct = centers.T                                              # (F, K)
    c2 = jnp.sum(centers * centers, axis=-1)[None, :]           # (1, K)
    inv = (-0.5) / jnp.broadcast_to(variances, (1, K))          # (1, K)

    OP = _round_up(max(O, 128), 128)                            # lane-dense output width
    wt = jnp.zeros((K, OP), jnp.float32).at[:, :O].set(w.T)     # (K, OP)
    bp = jnp.zeros((1, OP), jnp.float32).at[0, :O].set(b.reshape(-1))

    # Batch tile: sublane-aligned, capped at `batch_tile`; pad B up to a multiple.
    TB = min(batch_tile, _round_up(B, 8))
    B_pad = _round_up(B, TB)
    x_pad = jnp.zeros((B_pad, F), jnp.float32).at[:B, :].set(x)

    grid = (B_pad // TB,)
    pinned = lambda shape: pl.BlockSpec(shape, lambda i: (0, 0))

    out = pl.pallas_call(
        rbf_kernel,
        out_shape=jax.ShapeDtypeStruct((B_pad, OP), jnp.float32),
        grid=grid,
        in_specs=[
            pl.BlockSpec((TB, F), lambda i: (i, 0)),   # x tile walks the batch
            pinned((F, K)),                            # centers^T resident in VMEM
            pinned((1, K)),                            # ||c||^2
            pinned((1, K)),                            # -0.5 / var
            pinned((K, OP)),                           # W^T (padded)
            pinned((1, OP)),                           # bias (padded)
        ],
        out_specs=pl.BlockSpec((TB, OP), lambda i: (i, 0)),
        compiler_params=pltpu.CompilerParams(
            dimension_semantics=("parallel",),         # shards batch steps across TCs (v7x)
        ),
    )(x_pad, ct, c2, inv, wt, bp)

    return out[:B, :O]


def rbf_reference(x, centers, variances, w, b):
    d2 = jnp.maximum(
        jnp.sum(x * x, -1, keepdims=True)
        + jnp.sum(centers * centers, -1)[None, :]
        - 2.0 * x @ centers.T,
        0.0,
    )
    rbf = jnp.exp(-0.5 * d2 / variances)
    return rbf @ w.T + b[None, :]


if __name__ == "__main__":
    # Small, Pallas-friendly shapes consistent with the module's forward:
    # images (B, C, H, W) = (2, 4, 8, 8) -> F = 256, K = F = 256, O = 10.
    B, C, H, W = 2, 4, 8, 8
    F = C * H * W
    K = F
    O = 10

    key = jax.random.PRNGKey(0)
    k_img, k_cent, k_w, k_b = jax.random.split(key, 4)

    images = jax.random.normal(k_img, (B, C, H, W), dtype=jnp.float32)
    x = images.reshape(B, -1)                                   # data.view(B, -1)

    # centers = sum(self.data) / len(self.data)  (synthetic deterministic stand-in)
    centers = jax.random.normal(k_cent, (K, F), dtype=jnp.float32) * 0.1

    # The module uses variances = 0.01; with d^2 ~ O(F) that underflows exp() to 0
    # and only the bias path would be tested. Use variances ~ O(F) here so the
    # RBF + matmul path is numerically exercised (kernel semantics are unchanged).
    variances = jnp.full((1, K), float(F), dtype=jnp.float32)

    # nn.Linear(K, O): weight (O, K), bias (O,)  [PyTorch convention].
    w = jax.random.normal(k_w, (O, K), dtype=jnp.float32) * 0.02
    b = jax.random.normal(k_b, (O,), dtype=jnp.float32) * 0.02

    out = rbf_forward(x, centers, variances, w, b)
    out = jax.block_until_ready(out)

    ref = rbf_reference(x, centers, variances, w, b)
    assert out.shape == (B, O)
    assert jnp.allclose(out, ref, atol=1e-4, rtol=1e-4), (out, ref)

    print("KERNEL_OK")
</pallas_src>

<mosaic_0001>
module attributes {stable_mosaic.version = 11 : i64} {
  func.func @rbf_kernel(%arg0: i32, %arg1: memref<8x256xf32, #tpu.memory_space<vmem>>, %arg2: memref<256x256xf32, #tpu.memory_space<vmem>>, %arg3: memref<1x256xf32, #tpu.memory_space<vmem>>, %arg4: memref<1x256xf32, #tpu.memory_space<vmem>>, %arg5: memref<256x128xf32, #tpu.memory_space<vmem>>, %arg6: memref<1x128xf32, #tpu.memory_space<vmem>>, %arg7: memref<8x128xf32, #tpu.memory_space<vmem>>) attributes {dimension_semantics = [#tpu.dimension_semantics<parallel>], iteration_bounds = array<i64: 1>, scalar_prefetch = 0 : i64, scratch_operands = 0 : i64, tpu.core_type = #tpu.core_type<tc>, window_params = [{transform_indices = @transform_0, window_bounds = array<i64: 8, 256>}, {pipeline_mode = #tpu.pipeline_mode<synchronous>, transform_indices = @transform_1, window_bounds = array<i64: 256, 256>}, {pipeline_mode = #tpu.pipeline_mode<synchronous>, transform_indices = @transform_2, window_bounds = array<i64: 1, 256>}, {pipeline_mode = #tpu.pipeline_mode<synchronous>, transform_indices = @transform_3, window_bounds = array<i64: 1, 256>}, {pipeline_mode = #tpu.pipeline_mode<synchronous>, transform_indices = @transform_4, window_bounds = array<i64: 256, 128>}, {pipeline_mode = #tpu.pipeline_mode<synchronous>, transform_indices = @transform_5, window_bounds = array<i64: 1, 128>}, {transform_indices = @transform_6, window_bounds = array<i64: 8, 128>}]} {
    %c0 = arith.constant 0 : index
    %c0_0 = arith.constant 0 : index
    %0 = vector.load %arg1[%c0, %c0_0] : memref<8x256xf32, #tpu.memory_space<vmem>>, vector<8x256xf32>
    %1 = arith.mulf %0, %0 : vector<8x256xf32>
    %cst = arith.constant dense<0.000000e+00> : vector<8xf32>
    %2 = vector.multi_reduction <add>, %1, %cst [1] : vector<8x256xf32> to vector<8xf32>
    %3 = vector.shape_cast %2 : vector<8xf32> to vector<8x1xf32>
    %c0_1 = arith.constant 0 : index
    %c0_2 = arith.constant 0 : index
    %4 = vector.load %arg2[%c0_1, %c0_2] : memref<256x256xf32, #tpu.memory_space<vmem>>, vector<256x256xf32>
    %cst_3 = arith.constant dense<0.000000e+00> : vector<8x256xf32>
    %5 = tpu.matmul %0, %4, %cst_3 {dimension_numbers = #tpu.dot_dimension_numbers<[1], [0], [0], [1], [0, 0, 1, 1], [], []>} : vector<8x256xf32>, vector<256x256xf32>, vector<8x256xf32> -> vector<8x256xf32>
    %c0_4 = arith.constant 0 : index
    %c0_5 = arith.constant 0 : index
    %6 = vector.load %arg3[%c0_4, %c0_5] : memref<1x256xf32, #tpu.memory_space<vmem>>, vector<1x256xf32>
    %7 = vector.broadcast %3 : vector<8x1xf32> to vector<8x256xf32>
    %8 = vector.broadcast %6 : vector<1x256xf32> to vector<8x256xf32>
    %9 = arith.addf %7, %8 : vector<8x256xf32>
    %cst_6 = arith.constant 2.000000e+00 : f32
    %10 = vector.broadcast %cst_6 : f32 to vector<8x256xf32>
    %11 = arith.mulf %10, %5 : vector<8x256xf32>
    %12 = arith.subf %9, %11 : vector<8x256xf32>
    %cst_7 = arith.constant 0.000000e+00 : f32
    %13 = vector.broadcast %cst_7 : f32 to vector<8x256xf32>
    %14 = arith.maximumf %12, %13 : vector<8x256xf32>
    %c0_8 = arith.constant 0 : index
    %c0_9 = arith.constant 0 : index
    %15 = vector.load %arg4[%c0_8, %c0_9] : memref<1x256xf32, #tpu.memory_space<vmem>>, vector<1x256xf32>
    %16 = vector.broadcast %15 : vector<1x256xf32> to vector<8x256xf32>
    %17 = arith.mulf %16, %14 : vector<8x256xf32>
    %18 = math.exp %17 : vector<8x256xf32>
    %c0_10 = arith.constant 0 : index
    %c0_11 = arith.constant 0 : index
    %19 = vector.load %arg5[%c0_10, %c0_11] : memref<256x128xf32, #tpu.memory_space<vmem>>, vector<256x128xf32>
    %cst_12 = arith.constant dense<0.000000e+00> : vector<8x128xf32>
    %20 = tpu.matmul %18, %19, %cst_12 {dimension_numbers = #tpu.dot_dimension_numbers<[1], [0], [0], [1], [0, 0, 1, 1], [], []>} : vector<8x256xf32>, vector<256x128xf32>, vector<8x128xf32> -> vector<8x128xf32>
    %c0_13 = arith.constant 0 : index
    %c0_14 = arith.constant 0 : index
    %21 = vector.load %arg6[%c0_13, %c0_14] : memref<1x128xf32, #tpu.memory_space<vmem>>, vector<1x128xf32>
    %22 = vector.broadcast %21 : vector<1x128xf32> to vector<8x128xf32>
    %23 = arith.addf %20, %22 : vector<8x128xf32>
    %c0_15 = arith.constant 0 : index
    %c0_16 = arith.constant 0 : index
    %24 = vector.load %arg7[%c0_15, %c0_16] : memref<8x128xf32, #tpu.memory_space<vmem>>, vector<8x128xf32>
    tpu.vector_store %arg7[%c0_15, %c0_16], %23 {strides = array<i32>} : memref<8x128xf32, #tpu.memory_space<vmem>>, vector<8x128xf32>,
    return
  }
  func.func @transform_0(%arg0: i32) -> (i32, i32) {
    %c0_i32 = arith.constant 0 : i32
    %c0_i32_0 = arith.constant 0 : i32
    return %arg0, %c0_i32 : i32, i32
  }
  func.func @transform_1(%arg0: i32) -> (i32, i32) {
    %c0_i32 = arith.constant 0 : i32
    %c0_i32_0 = arith.constant 0 : i32
    %c0_i32_1 = arith.constant 0 : i32
    return %c0_i32, %c0_i32_0 : i32, i32
  }
  func.func @transform_2(%arg0: i32) -> (i32, i32) {
    %c0_i32 = arith.constant 0 : i32
    %c0_i32_0 = arith.constant 0 : i32
    %c0_i32_1 = arith.constant 0 : i32
    return %c0_i32, %c0_i32_0 : i32, i32
  }
  func.func @transform_3(%arg0: i32) -> (i32, i32) {
    %c0_i32 = arith.constant 0 : i32
    %c0_i32_0 = arith.constant 0 : i32
    %c0_i32_1 = arith.constant 0 : i32
    return %c0_i32, %c0_i32_0 : i32, i32
  }
  func.func @transform_4(%arg0: i32) -> (i32, i32) {
    %c0_i32 = arith.constant 0 : i32
    %c0_i32_0 = arith.constant 0 : i32
    %c0_i32_1 = arith.constant 0 : i32
    return %c0_i32, %c0_i32_0 : i32, i32
  }
  func.func @transform_5(%arg0: i32) -> (i32, i32) {
    %c0_i32 = arith.constant 0 : i32
    %c0_i32_0 = arith.constant 0 : i32
    %c0_i32_1 = arith.constant 0 : i32
    return %c0_i32, %c0_i32_0 : i32, i32
  }
  func.func @transform_6(%arg0: i32) -> (i32, i32) {
    %c0_i32 = arith.constant 0 : i32
    %c0_i32_0 = arith.constant 0 : i32
    return %arg0, %c0_i32 : i32, i32
  }
}

</mosaic_0001>

<llo_original>
// kernel: rbf_forward.1
$region0: #{rbf_forward.1}
  #allocation0 [shape = 'u32[]', space=smem, size = 0x4, offset = 0x4, fixed_abs, tag = 'smem constant byte address 0x4 - core index']
  #allocation1 [shape = 'u32[144,128]{1,0:T(1,128)}', space=vmem, size = 0x12000, scoped, tag = 'internal scratch']
  %s0 = inlined_call_operand.vmem [shape: f32[8,256], index: 0, kind: input, shape index: {}]
  %s1 = inlined_call_operand.vmem [shape: f32[256,256], index: 1, kind: input, shape index: {}]
  %s2 = inlined_call_operand.vmem [shape: f32[1,256], index: 2, kind: input, shape index: {}]
  %s3 = inlined_call_operand.vmem [shape: f32[1,256], index: 3, kind: input, shape index: {}]
  %s4 = inlined_call_operand.vmem [shape: f32[256,128], index: 4, kind: input, shape index: {}]
  %s5 = inlined_call_operand.vmem [shape: f32[1,128], index: 5, kind: input, shape index: {}]
  %s6 = inlined_call_operand.vmem [shape: f32[8,128], index: 6, kind: output, shape index: {}]
  %s7 = sld [smem:[#allocation0]]
  $region34: #{rbf_forward.1} parent=0
    _
  %s9 = ssub.s32 1, %s7
  %s10 = scalar_select 0, %s9, %s7
  // Predicated region
  $region2: #{rbf_forward.1} parent=0 // pred_check
    _
  $region3: #{rbf_forward.1} parent=0 // pred_check_branch
    %12 = sbr.rel (0) target = $region5
  $region4: #{rbf_forward.1} parent=0 // pred_region
    _
  $region5: #{rbf_forward.1} parent=0 // pred_fallthru
    _
  // Predicated region
  $region6: #{rbf_forward.1} parent=0 // pred_check
    _
  $region7: #{rbf_forward.1} parent=0 // pred_check_branch
    %14 = sbr.rel (0) target = $region9
  $region8: #{rbf_forward.1} parent=0 // pred_region
    _
  $region9: #{rbf_forward.1} parent=0 // pred_fallthru
    _
  // Predicated region
  $region10: #{rbf_forward.1} parent=0 // pred_check
    _
  $region11: #{rbf_forward.1} parent=0 // pred_check_branch
    %16 = sbr.rel (0) target = $region13
  $region12: #{rbf_forward.1} parent=0 // pred_region
    _
  $region13: #{rbf_forward.1} parent=0 // pred_fallthru
    _
  // Predicated region
  $region14: #{rbf_forward.1} parent=0 // pred_check
    _
  $region15: #{rbf_forward.1} parent=0 // pred_check_branch
    %18 = sbr.rel (0) target = $region17
  $region16: #{rbf_forward.1} parent=0 // pred_region
    _
  $region17: #{rbf_forward.1} parent=0 // pred_fallthru
    _
  // Predicated region
  $region18: #{rbf_forward.1} parent=0 // pred_check
    _
  $region19: #{rbf_forward.1} parent=0 // pred_check_branch
    %20 = sbr.rel (0) target = $region21
  $region20: #{rbf_forward.1} parent=0 // pred_region
    _
  $region21: #{rbf_forward.1} parent=0 // pred_fallthru
    _
  // Predicated region
  $region22: #{rbf_forward.1} parent=0 // pred_check
    _
  $region23: #{rbf_forward.1} parent=0 // pred_check_branch
    %22 = sbr.rel (0) target = $region25
  $region24: #{rbf_forward.1} parent=0 // pred_region
    _
  $region25: #{rbf_forward.1} parent=0 // pred_fallthru
    _
  %v23 = vld [vmem:[%s0] sm:$0xff]
  %v24 = vld [vmem:[%s0 + $0x8] sm:$0xff]
  %v25 = vmul.f32 %v23, %v23
  %v26 = vmul.f32 %v24, %v24
  %v27 = vadd.f32 %v25, %v26
  %28 = vadd.xlane.f32.xlu0 %v27
  %v29 = vpop.xlane.xlu0 %28
  %v30 = vld [vmem:[%s1] sm:$0xff]
  %v31 = vld [vmem:[%s1 + $0x8] sm:$0xff]
  %v32 = vld [vmem:[%s1 + $0x10] sm:$0xff]
  %v33 = vld [vmem:[%s1 + $0x18] sm:$0xff]
  %v34 = vld [vmem:[%s1 + $0x20] sm:$0xff]
  %v35 = vld [vmem:[%s1 + $0x28] sm:$0xff]
  %v36 = vld [vmem:[%s1 + $0x30] sm:$0xff]
  %v37 = vld [vmem:[%s1 + $0x38] sm:$0xff]
  %v38 = vld [vmem:[%s1 + $0x40] sm:$0xff]
  %v39 = vld [vmem:[%s1 + $0x48] sm:$0xff]
  %v40 = vld [vmem:[%s1 + $0x50] sm:$0xff]
  %v41 = vld [vmem:[%s1 + $0x58] sm:$0xff]
  %v42 = vld [vmem:[%s1 + $0x60] sm:$0xff]
  %v43 = vld [vmem:[%s1 + $0x68] sm:$0xff]
  %v44 = vld [vmem:[%s1 + $0x70] sm:$0xff]
  %v45 = vld [vmem:[%s1 + $0x78] sm:$0xff]
  %v46 = vld [vmem:[%s1 + $0x80] sm:$0xff]
  %v47 = vld [vmem:[%s1 + $0x88] sm:$0xff]
  %v48 = vld [vmem:[%s1 + $0x90] sm:$0xff]
  %v49 = vld [vmem:[%s1 + $0x98] sm:$0xff]
  %v50 = vld [vmem:[%s1 + $0xa0] sm:$0xff]
  %v51 = vld [vmem:[%s1 + $0xa8] sm:$0xff]
  %v52 = vld [vmem:[%s1 + $0xb0] sm:$0xff]
  %v53 = vld [vmem:[%s1 + $0xb8] sm:$0xff]
  %v54 = vld [vmem:[%s1 + $0xc0] sm:$0xff]
  %v55 = vld [vmem:[%s1 + $0xc8] sm:$0xff]
  %v56 = vld [vmem:[%s1 + $0xd0] sm:$0xff]
  %v57 = vld [vmem:[%s1 + $0xd8] sm:$0xff]
  %v58 = vld [vmem:[%s1 + $0xe0] sm:$0xff]
  %v59 = vld [vmem:[%s1 + $0xe8] sm:$0xff]
  %v60 = vld [vmem:[%s1 + $0xf0] sm:$0xff]
  %v61 = vld [vmem:[%s1 + $0xf8] sm:$0xff]
  %v62 = vld [vmem:[%s1 + $0x100] sm:$0xff]
  %v63 = vld [vmem:[%s1 + $0x108] sm:$0xff]
  %v64 = vld [vmem:[%s1 + $0x110] sm:$0xff]
  %v65 = vld [vmem:[%s1 + $0x118] sm:$0xff]
  %v66 = vld [vmem:[%s1 + $0x120] sm:$0xff]
  %v67 = vld [vmem:[%s1 + $0x128] sm:$0xff]
  %v68 = vld [vmem:[%s1 + $0x130] sm:$0xff]
  %v69 = vld [vmem:[%s1 + $0x138] sm:$0xff]
  %v70 = vld [vmem:[%s1 + $0x140] sm:$0xff]
  %v71 = vld [vmem:[%s1 + $0x148] sm:$0xff]
  %v72 = vld [vmem:[%s1 + $0x150] sm:$0xff]
  %v73 = vld [vmem:[%s1 + $0x158] sm:$0xff]
  %v74 = vld [vmem:[%s1 + $0x160] sm:$0xff]
  %v75 = vld [vmem:[%s1 + $0x168] sm:$0xff]
  %v76 = vld [vmem:[%s1 + $0x170] sm:$0xff]
  %v77 = vld [vmem:[%s1 + $0x178] sm:$0xff]
  %v78 = vld [vmem:[%s1 + $0x180] sm:$0xff]
  %v79 = vld [vmem:[%s1 + $0x188] sm:$0xff]
  %v80 = vld [vmem:[%s1 + $0x190] sm:$0xff]
  %v81 = vld [vmem:[%s1 + $0x198] sm:$0xff]
  %v82 = vld [vmem:[%s1 + $0x1a0] sm:$0xff]
  %v83 = vld [vmem:[%s1 + $0x1a8] sm:$0xff]
  %v84 = vld [vmem:[%s1 + $0x1b0] sm:$0xff]
  %v85 = vld [vmem:[%s1 + $0x1b8] sm:$0xff]
  %v86 = vld [vmem:[%s1 + $0x1c0] sm:$0xff]
  %v87 = vld [vmem:[%s1 + $0x1c8] sm:$0xff]
  %v88 = vld [vmem:[%s1 + $0x1d0] sm:$0xff]
  %v89 = vld [vmem:[%s1 + $0x1d8] sm:$0xff]
  %v90 = vld [vmem:[%s1 + $0x1e0] sm:$0xff]
  %v91 = vld [vmem:[%s1 + $0x1e8] sm:$0xff]
  %v92 = vld [vmem:[%s1 + $0x1f0] sm:$0xff]
  %v93 = vld [vmem:[%s1 + $0x1f8] sm:$0xff]
  %94 = vmatprep.subr.mxu0 %v31
  %95 = vmatpush1.msra.mxu0 %v30
  %96 = vmatprep.subr.mxu0 %v33
  %97 = vmatpush1.msra.mxu0 %v32
  %98 = vmatprep.subr.mxu0 %v35
  %99 = vmatpush1.msra.mxu0 %v34
  %100 = vmatprep.subr.mxu0 %v37
  %101 = vmatpush1.msra.mxu0 %v36
  %102 = vmatprep.subr.mxu0 %v39
  %103 = vmatpush1.msra.mxu0 %v38
  %104 = vmatprep.subr.mxu0 %v41
  %105 = vmatpush1.msra.mxu0 %v40
  %106 = vmatprep.subr.mxu0 %v43
  %107 = vmatpush1.msra.mxu0 %v42
  %108 = vmatprep.subr.mxu0 %v45
  %109 = vmatpush1.msra.mxu0 %v44
  %110 = vmatprep.subr.mxu0 %v47
  %111 = vmatpush1.msra.mxu0 %v46
  %112 = vmatprep.subr.mxu0 %v49
  %113 = vmatpush1.msra.mxu0 %v48
  %114 = vmatprep.subr.mxu0 %v51
  %115 = vmatpush1.msra.mxu0 %v50
  %116 = vmatprep.subr.mxu0 %v53
  %117 = vmatpush1.msra.mxu0 %v52
  %118 = vmatprep.subr.mxu0 %v55
  %119 = vmatpush1.msra.mxu0 %v54
  %120 = vmatprep.subr.mxu0 %v57
  %121 = vmatpush1.msra.mxu0 %v56
  %122 = vmatprep.subr.mxu0 %v59
  %123 = vmatpush1.msra.mxu0 %v58
  %124 = vmatprep.subr.mxu0 %v61
  %125 = vmatpush1.msra.mxu0 %v60
  %126 = vmatprep.subr.mxu0 %v63
  %127 = vmatpush1.msra.mxu0 %v62
  %128 = vmatprep.subr.mxu0 %v65
  %129 = vmatpush1.msra.mxu0 %v64
  %130 = vmatprep.subr.mxu0 %v67
  %131 = vmatpush1.msra.mxu0 %v66
  %132 = vmatprep.subr.mxu0 %v69
  %133 = vmatpush1.msra.mxu0 %v68
  %134 = vmatprep.subr.mxu0 %v71
  %135 = vmatpush1.msra.mxu0 %v70
  %136 = vmatprep.subr.mxu0 %v73
  %137 = vmatpush1.msra.mxu0 %v72
  %138 = vmatprep.subr.mxu0 %v75
  %139 = vmatpush1.msra.mxu0 %v74
  %140 = vmatprep.subr.mxu0 %v77
  %141 = vmatpush1.msra.mxu0 %v76
  %142 = vmatprep.subr.mxu0 %v79
  %143 = vmatpush1.msra.mxu0 %v78
  %144 = vmatprep.subr.mxu0 %v81
  %145 = vmatpush1.msra.mxu0 %v80
  %146 = vmatprep.subr.mxu0 %v83
  %147 = vmatpush1.msra.mxu0 %v82
  %148 = vmatprep.subr.mxu0 %v85
  %149 = vmatpush1.msra.mxu0 %v84
  %150 = vmatprep.subr.mxu0 %v87
  %151 = vmatpush1.msra.mxu0 %v86
  %152 = vmatprep.subr.mxu0 %v89
  %153 = vmatpush1.msra.mxu0 %v88
  %154 = vmatprep.subr.mxu0 %v91
  %155 = vmatpush1.msra.mxu0 %v90
  %156 = vmatprep.subr.mxu0 %v93
  %157 = vmatpush1.msra.mxu0 %v92
  %158 = vmatprep.mubr.f32.mxu0 %v24
  %159 = vmatmul.mubr.f32.gmra.mrb[0].mxu0 %v23
  %v160 = vpop.f32.mrb[0].mxu0
  %v161 = vadd.f32 0.0, %v160
  %v162 = vpop.f32.mrb[0].mxu0
  %v163 = vadd.f32 0.0, %v162
  %164 = vdwg.mxu0
  %v165 = vld [vmem:[%s2] sm:$0x3]
  %v167 = vlaneseq
  %v168 = vshrl.u32 %v167, 7
  %v169 = vsub.s32 0, %v168
  %v170 = vrot.slane %v165, %v169
  %v171 = vlaneseq
  %v172 = vshrl.u32 %v171, 7
  %v173 = vsub.s32 1, %v172
  %v174 = vrot.slane %v165, %v173
  %v177 = vadd.f32 %v29, %v170
  %v178 = vadd.f32 %v29, %v174
  %v179 = vmul.f32 %v161, 2.0
  %v180 = vmul.f32 %v163, 2.0
  %v181 = vsub.f32 %v177, %v179
  %v182 = vsub.f32 %v178, %v180
  %v183 = vmax.f32 %v181, 0.0
  %v184 = vmax.f32 %v182, 0.0
  %v185 = vld [vmem:[%s3] sm:$0x3]
  %v187 = vlaneseq
  %v188 = vshrl.u32 %v187, 7
  %v189 = vsub.s32 0, %v188
  %v190 = vrot.slane %v185, %v189
  %v191 = vlaneseq
  %v192 = vshrl.u32 %v191, 7
  %v193 = vsub.s32 1, %v192
  %v194 = vrot.slane %v185, %v193
  %v197 = vmul.f32 %v190, %v183
  %v198 = vmul.f32 %v194, %v184
  %v199 = vmul.f32 %v197, 1.442695
  %v200 = vpow.pop %v199
  %v201 = vmul.f32 %v198, 1.442695
  %v202 = vpow.pop %v201
  %v203 = vld [vmem:[%s4] sm:$0xff]
  %v204 = vld [vmem:[%s4 + $0x8] sm:$0xff]
  %v205 = vld [vmem:[%s4 + $0x10] sm:$0xff]
  %v206 = vld [vmem:[%s4 + $0x18] sm:$0xff]
  %v207 = vld [vmem:[%s4 + $0x20] sm:$0xff]
  %v208 = vld [vmem:[%s4 + $0x28] sm:$0xff]
  %v209 = vld [vmem:[%s4 + $0x30] sm:$0xff]
  %v210 = vld [vmem:[%s4 + $0x38] sm:$0xff]
  %v211 = vld [vmem:[%s4 + $0x40] sm:$0xff]
  %v212 = vld [vmem:[%s4 + $0x48] sm:$0xff]
  %v213 = vld [vmem:[%s4 + $0x50] sm:$0xff]
  %v214 = vld [vmem:[%s4 + $0x58] sm:$0xff]
  %v215 = vld [vmem:[%s4 + $0x60] sm:$0xff]
  %v216 = vld [vmem:[%s4 + $0x68] sm:$0xff]
  %v217 = vld [vmem:[%s4 + $0x70] sm:$0xff]
  %v218 = vld [vmem:[%s4 + $0x78] sm:$0xff]
  %v219 = vld [vmem:[%s4 + $0x80] sm:$0xff]
  %v220 = vld [vmem:[%s4 + $0x88] sm:$0xff]
  %v221 = vld [vmem:[%s4 + $0x90] sm:$0xff]
  %v222 = vld [vmem:[%s4 + $0x98] sm:$0xff]
  %v223 = vld [vmem:[%s4 + $0xa0] sm:$0xff]
  %v224 = vld [vmem:[%s4 + $0xa8] sm:$0xff]
  %v225 = vld [vmem:[%s4 + $0xb0] sm:$0xff]
  %v226 = vld [vmem:[%s4 + $0xb8] sm:$0xff]
  %v227 = vld [vmem:[%s4 + $0xc0] sm:$0xff]
  %v228 = vld [vmem:[%s4 + $0xc8] sm:$0xff]
  %v229 = vld [vmem:[%s4 + $0xd0] sm:$0xff]
  %v230 = vld [vmem:[%s4 + $0xd8] sm:$0xff]
  %v231 = vld [vmem:[%s4 + $0xe0] sm:$0xff]
  %v232 = vld [vmem:[%s4 + $0xe8] sm:$0xff]
  %v233 = vld [vmem:[%s4 + $0xf0] sm:$0xff]
  %v234 = vld [vmem:[%s4 + $0xf8] sm:$0xff]
  %v235 = vld [vmem:[%s5] sm:$0x1]
  %v237 = vlaneseq
  %v238 = vshrl.u32 %v237, 7
  %v239 = vsub.s32 0, %v238
  %v240 = vrot.slane %v235, %v239
  %242 = vmatprep.subr.mxu0 0.0
  %243 = vmatpush1.msra.mxu0 %v203
  %244 = vmatprep.subr.mxu0 0.0
  %245 = vmatpush1.msra.mxu0 %v204
  %246 = vmatprep.subr.mxu0 0.0
  %247 = vmatpush1.msra.mxu0 %v205
  %248 = vmatprep.subr.mxu0 0.0
  %249 = vmatpush1.msra.mxu0 %v206
  %250 = vmatprep.subr.mxu0 0.0
  %251 = vmatpush1.msra.mxu0 %v207
  %252 = vmatprep.subr.mxu0 0.0
  %253 = vmatpush1.msra.mxu0 %v208
  %254 = vmatprep.subr.mxu0 0.0
  %255 = vmatpush1.msra.mxu0 %v209
  %256 = vmatprep.subr.mxu0 0.0
  %257 = vmatpush1.msra.mxu0 %v210
  %258 = vmatprep.subr.mxu0 0.0
  %259 = vmatpush1.msra.mxu0 %v211
  %260 = vmatprep.subr.mxu0 0.0
  %261 = vmatpush1.msra.mxu0 %v212
  %262 = vmatprep.subr.mxu0 0.0
  %263 = vmatpush1.msra.mxu0 %v213
  %264 = vmatprep.subr.mxu0 0.0
  %265 = vmatpush1.msra.mxu0 %v214
  %266 = vmatprep.subr.mxu0 0.0
  %267 = vmatpush1.msra.mxu0 %v215
  %268 = vmatprep.subr.mxu0 0.0
  %269 = vmatpush1.msra.mxu0 %v216
  %270 = vmatprep.subr.mxu0 0.0
  %271 = vmatpush1.msra.mxu0 %v217
  %272 = vmatprep.subr.mxu0 0.0
  %273 = vmatpush1.msra.mxu0 %v218
  %274 = vmatprep.subr.mxu0 0.0
  %275 = vmatpush1.msra.mxu0 %v219
  %276 = vmatprep.subr.mxu0 0.0
  %277 = vmatpush1.msra.mxu0 %v220
  %278 = vmatprep.subr.mxu0 0.0
  %279 = vmatpush1.msra.mxu0 %v221
  %280 = vmatprep.subr.mxu0 0.0
  %281 = vmatpush1.msra.mxu0 %v222
  %282 = vmatprep.subr.mxu0 0.0
  %283 = vmatpush1.msra.mxu0 %v223
  %284 = vmatprep.subr.mxu0 0.0
  %285 = vmatpush1.msra.mxu0 %v224
  %286 = vmatprep.subr.mxu0 0.0
  %287 = vmatpush1.msra.mxu0 %v225
  %288 = vmatprep.subr.mxu0 0.0
  %289 = vmatpush1.msra.mxu0 %v226
  %290 = vmatprep.subr.mxu0 0.0
  %291 = vmatpush1.msra.mxu0 %v227
  %292 = vmatprep.subr.mxu0 0.0
  %293 = vmatpush1.msra.mxu0 %v228
  %294 = vmatprep.subr.mxu0 0.0
  %295 = vmatpush1.msra.mxu0 %v229
  %296 = vmatprep.subr.mxu0 0.0
  %297 = vmatpush1.msra.mxu0 %v230
  %298 = vmatprep.subr.mxu0 0.0
  %299 = vmatpush1.msra.mxu0 %v231
  %300 = vmatprep.subr.mxu0 0.0
  %301 = vmatpush1.msra.mxu0 %v232
  %302 = vmatprep.subr.mxu0 0.0
  %303 = vmatpush1.msra.mxu0 %v233
  %304 = vmatprep.subr.mxu0 0.0
  %305 = vmatpush1.msra.mxu0 %v234
  %306 = vmatprep.mubr.f32.mxu0 %v202
  %307 = vmatmul.mubr.f32.gmra.mrb[0].mxu0 %v200
  %v308 = vpop.f32.mrb[0].mxu0
  %v309 = vadd.f32 %v240, %v308
  %v310 = vpop.f32.mrb[0].mxu0
  %311 = vdwg.mxu0
  %312 = vst [vmem:[%s6] sm:$0xff] %v309
  // Predicated region
  $region26: #{rbf_forward.1} parent=0 // pred_check
    _
  $region27: #{rbf_forward.1} parent=0 // pred_check_branch
    %314 = sbr.rel (0) target = $region29
  $region28: #{rbf_forward.1} parent=0 // pred_region
    _
  $region29: #{rbf_forward.1} parent=0 // pred_fallthru
    _
  // Predicated region
  $region30: #{rbf_forward.1} parent=0 // pred_check
    _
  $region31: #{rbf_forward.1} parent=0 // pred_check_branch
    %316 = sbr.rel (0) target = $region33
  $region32: #{rbf_forward.1} parent=0 // pred_region
    _
  $region33: #{rbf_forward.1} parent=0 // pred_fallthru
    _

</llo_original>
